<compile_context>
chip_gen: v5e
topology: v5e:2x2
jax: 0.10.0
libtpu: 0.0.40
codegen_flags: <defaults>
</compile_context>

<pallas_src>
import math
import jax
import jax.numpy as jnp
from jax.experimental import pallas as pl
from jax.experimental.pallas import tpu as pltpu


# ---------------------------------------------------------------------------
# Pallas kernel: fused (im2col conv GEMM) + (multi-hot temporal-table GEMM)
# ---------------------------------------------------------------------------
def _data_embedding_kernel(xi_ref, xm_ref, w_ref, tab_ref, o_ref):
    # xi_ref : (Rt, 3*c_in)  im2col rows of the circularly padded values
    # xm_ref : (Rt, 4)       int32 absolute row indices into the combined table
    # w_ref  : (3*c_in, Dp)  flattened tap-major conv weight (grid-resident)
    # tab_ref: (76, Dp)      [month|day|weekday|hour] sinusoid tables (resident)
    # o_ref  : (Rt, Dp)
    rt = o_ref.shape[0]
    n_tab = tab_ref.shape[0]

    # value (token) embedding: single im2col GEMM, f32 accumulation on the MXU.
    acc = jnp.dot(xi_ref[...], w_ref[...], preferred_element_type=jnp.float32)

    # temporal embedding: multi-hot @ table GEMM (no HBM round trip of the
    # (B, L, d_model) temporal tensor, no data-dependent gather needed).
    idx = xm_ref[...]                                               # (Rt, 4) int32
    rows = jax.lax.broadcasted_iota(jnp.int32, (rt, n_tab), 1)      # (Rt, 76)
    multihot = (idx[:, 0:1] == rows).astype(jnp.float32)
    for c in range(1, 4):                                           # static unroll
        multihot = multihot + (idx[:, c:c + 1] == rows).astype(jnp.float32)
    acc = acc + jnp.dot(multihot, tab_ref[...],
                        preferred_element_type=jnp.float32)

    # TODO(synk): Dropout(p=0.1) is identity in eval mode; no pltpu.prng_* mask.
    o_ref[...] = acc.astype(o_ref.dtype)


def _round_up(x, m):
    return ((x + m - 1) // m) * m


def data_embedding_pallas(xi, xm, w_flat, tab, row_tile):
    n_rows, k3 = xi.shape
    n_tab, dp = tab.shape
    grid = (n_rows // row_tile,)
    return pl.pallas_call(
        _data_embedding_kernel,
        out_shape=jax.ShapeDtypeStruct((n_rows, dp), jnp.float32),
        grid=grid,
        in_specs=[
            pl.BlockSpec((row_tile, k3), lambda i: (i, 0)),
            pl.BlockSpec((row_tile, 4), lambda i: (i, 0)),
            pl.BlockSpec((k3, dp), lambda i: (0, 0)),      # resident across grid
            pl.BlockSpec((n_tab, dp), lambda i: (0, 0)),   # resident across grid
        ],
        out_specs=pl.BlockSpec((row_tile, dp), lambda i: (i, 0)),
        compiler_params=pltpu.CompilerParams(
            dimension_semantics=("parallel",),
            vmem_limit_bytes=32 * 1024 * 1024,
        ),
    )(xi, xm, w_flat, tab)


# ---------------------------------------------------------------------------
# Parameter / table construction (plain JAX glue, deterministic)
# ---------------------------------------------------------------------------
def sinusoid_table(n_pos, d_model):
    """Same formula as FixedEmbedding / PositionalEmbedding in the PyTorch code."""
    position = jnp.arange(n_pos, dtype=jnp.float32)[:, None]                 # (n, 1)
    div_term = jnp.exp(jnp.arange(0, d_model, 2, dtype=jnp.float32)
                       * -(math.log(10000.0) / d_model))                     # (d/2,)
    tab = jnp.zeros((n_pos, d_model), dtype=jnp.float32)
    tab = tab.at[:, 0::2].set(jnp.sin(position * div_term))
    tab = tab.at[:, 1::2].set(jnp.cos(position * div_term))
    return tab


# table sizes for x_mark columns [month, day, weekday, hour] (embed='fixed', freq='h')
_TEMPORAL_SIZES = (13, 32, 7, 24)


def combined_temporal_table(d_model):
    """Concatenated fixed sinusoid tables + per-column row offsets."""
    tabs = [sinusoid_table(s, d_model) for s in _TEMPORAL_SIZES]
    offsets = jnp.array([0, 13, 13 + 32, 13 + 32 + 7], dtype=jnp.int32)
    return jnp.concatenate(tabs, axis=0), offsets                            # (76, d), (4,)


def make_token_conv_weight(key, c_in, d_model):
    """Kaiming-normal (fan_in, leaky_relu) Conv1d weight, returned tap-major
    as (3, c_in, d_model) so flattening gives the (3*c_in, d_model) GEMM matrix."""
    a = 0.01
    gain = math.sqrt(2.0 / (1.0 + a * a))
    fan_in = c_in * 3
    std = gain / math.sqrt(fan_in)
    w_torch_layout = jax.random.normal(key, (d_model, c_in, 3), jnp.float32) * std
    return jnp.transpose(w_torch_layout, (2, 1, 0))                          # (3, c_in, d)


# ---------------------------------------------------------------------------
# Forward wrapper
# ---------------------------------------------------------------------------
def data_embedding_wo_pos_forward(x, x_mark, conv_w):
    B, L, c_in = x.shape
    d_model = conv_w.shape[-1]

    # circular padding (padding=1 each side) along the sequence axis
    x_pad = jnp.concatenate([x[:, -1:, :], x, x[:, :1, :]], axis=1)          # (B, L+2, c)
    # im2col, tap-major: xi[..., k*c_in + c] = x_pad[:, l+k, c]
    xi = jnp.concatenate([x_pad[:, k:k + L, :] for k in range(3)], axis=-1)  # (B, L, 3c)
    xi = xi.reshape(B * L, 3 * c_in)

    # compact temporal indices: absolute rows into the combined (76, d) table
    tab, offsets = combined_temporal_table(d_model)
    xm = x_mark[..., :4].astype(jnp.int32) + offsets[None, None, :]          # (B, L, 4)
    xm = xm.reshape(B * L, 4)

    # conv weight (3, c_in, d) tap-major -> (3*c_in, d)
    w_flat = conv_w.reshape(3 * c_in, d_model)

    # lane-pad d_model to a multiple of 128 for unmasked (lane-dense) stores
    dp = _round_up(d_model, 128)
    if dp != d_model:
        w_flat = jnp.pad(w_flat, ((0, 0), (0, dp - d_model)))
        tab = jnp.pad(tab, ((0, 0), (0, dp - d_model)))

    # flatten (B, L) into rows and tile; pad rows to a multiple of the tile
    n = B * L
    row_tile = min(512, _round_up(n, 8))
    n_pad = _round_up(n, row_tile)
    if n_pad != n:
        xi = jnp.pad(xi, ((0, n_pad - n), (0, 0)))
        xm = jnp.pad(xm, ((0, n_pad - n), (0, 0)))   # index 0 is valid in the table

    out = data_embedding_pallas(xi, xm, w_flat, tab, row_tile)               # (n_pad, dp)
    return out[:n, :d_model].reshape(B, L, d_model)


# ---------------------------------------------------------------------------
# Pure-JAX reference (different code path: shifted einsums + direct gathers)
# ---------------------------------------------------------------------------
def data_embedding_wo_pos_reference(x, x_mark, conv_w):
    B, L, c_in = x.shape
    d_model = conv_w.shape[-1]
    x_pad = jnp.concatenate([x[:, -1:, :], x, x[:, :1, :]], axis=1)
    val = sum(jnp.einsum("blc,cd->bld", x_pad[:, k:k + L, :], conv_w[k])
              for k in range(3))
    xm = x_mark.astype(jnp.int32)
    month_t, day_t, weekday_t, hour_t = (sinusoid_table(s, d_model)
                                         for s in _TEMPORAL_SIZES)
    temporal = (jnp.take(hour_t, xm[..., 3], axis=0)
                + jnp.take(weekday_t, xm[..., 2], axis=0)
                + jnp.take(day_t, xm[..., 1], axis=0)
                + jnp.take(month_t, xm[..., 0], axis=0))
    return val + temporal


if __name__ == "__main__":
    B, L, c_in, d_model = 2, 8, 4, 32

    key = jax.random.PRNGKey(0)
    k_w, k_x, k_m = jax.random.split(key, 3)

    conv_w = make_token_conv_weight(k_w, c_in, d_model)              # (3, c_in, d_model)
    x = jax.random.normal(k_x, (B, L, c_in), jnp.float32)            # values
    # x_mark columns: [month(0..12), day(0..31), weekday(0..6), hour(0..23)]
    x_mark = jnp.stack(
        [
            jax.random.randint(jax.random.fold_in(k_m, 0), (B, L), 0, 13),
            jax.random.randint(jax.random.fold_in(k_m, 1), (B, L), 0, 32),
            jax.random.randint(jax.random.fold_in(k_m, 2), (B, L), 0, 7),
            jax.random.randint(jax.random.fold_in(k_m, 3), (B, L), 0, 24),
        ],
        axis=-1,
    ).astype(jnp.float32)                                            # (B, L, 4)

    out = data_embedding_wo_pos_forward(x, x_mark, conv_w)
    out = jax.block_until_ready(out)

    ref = data_embedding_wo_pos_reference(x, x_mark, conv_w)
    assert out.shape == (B, L, d_model)
    max_err = float(jnp.max(jnp.abs(out - ref)))
    assert jnp.allclose(out, ref, atol=1e-4, rtol=1e-4), max_err

    print("KERNEL_OK")
</pallas_src>

<mosaic_0001>
module attributes {stable_mosaic.version = 11 : i64} {
  func.func @_data_embedding_kernel(%arg0: i32, %arg1: memref<16x12xf32, #tpu.memory_space<vmem>>, %arg2: memref<16x4xi32, #tpu.memory_space<vmem>>, %arg3: memref<12x128xf32, #tpu.memory_space<vmem>>, %arg4: memref<76x128xf32, #tpu.memory_space<vmem>>, %arg5: memref<16x128xf32, #tpu.memory_space<vmem>>) attributes {dimension_semantics = [#tpu.dimension_semantics<parallel>], iteration_bounds = array<i64: 1>, scalar_prefetch = 0 : i64, scratch_operands = 0 : i64, tpu.core_type = #tpu.core_type<tc>, window_params = [{transform_indices = @transform_0, window_bounds = array<i64: 16, 12>}, {transform_indices = @transform_1, window_bounds = array<i64: 16, 4>}, {pipeline_mode = #tpu.pipeline_mode<synchronous>, transform_indices = @transform_2, window_bounds = array<i64: 12, 128>}, {pipeline_mode = #tpu.pipeline_mode<synchronous>, transform_indices = @transform_3, window_bounds = array<i64: 76, 128>}, {transform_indices = @transform_4, window_bounds = array<i64: 16, 128>}]} {
    %c0 = arith.constant 0 : index
    %c0_0 = arith.constant 0 : index
    %0 = vector.load %arg1[%c0, %c0_0] : memref<16x12xf32, #tpu.memory_space<vmem>>, vector<16x12xf32>
    %c0_1 = arith.constant 0 : index
    %c0_2 = arith.constant 0 : index
    %1 = vector.load %arg3[%c0_1, %c0_2] : memref<12x128xf32, #tpu.memory_space<vmem>>, vector<12x128xf32>
    %cst = arith.constant dense<0.000000e+00> : vector<16x128xf32>
    %2 = tpu.matmul %0, %1, %cst {dimension_numbers = #tpu.dot_dimension_numbers<[1], [0], [0], [1], [0, 0, 1, 1], [], []>} : vector<16x12xf32>, vector<12x128xf32>, vector<16x128xf32> -> vector<16x128xf32>
    %c0_3 = arith.constant 0 : index
    %c0_4 = arith.constant 0 : index
    %3 = vector.load %arg2[%c0_3, %c0_4] : memref<16x4xi32, #tpu.memory_space<vmem>>, vector<16x4xi32>
    %4 = tpu.iota {dimensions = array<i32: 1>} : vector<16x76xi32>
    %5 = vector.extract_strided_slice %3 {offsets = [0, 0], sizes = [16, 1], strides = [1, 1]} : vector<16x4xi32> to vector<16x1xi32>
    %6 = vector.broadcast %5 : vector<16x1xi32> to vector<16x76xi32>
    %7 = arith.cmpi eq, %6, %4 : vector<16x76xi32>
    %8 = arith.extui %7 : vector<16x76xi1> to vector<16x76xi32>
    %9 = arith.sitofp %8 : vector<16x76xi32> to vector<16x76xf32>
    %10 = vector.extract_strided_slice %3 {offsets = [0, 1], sizes = [16, 1], strides = [1, 1]} : vector<16x4xi32> to vector<16x1xi32>
    %11 = vector.broadcast %10 : vector<16x1xi32> to vector<16x76xi32>
    %12 = arith.cmpi eq, %11, %4 : vector<16x76xi32>
    %13 = arith.extui %12 : vector<16x76xi1> to vector<16x76xi32>
    %14 = arith.sitofp %13 : vector<16x76xi32> to vector<16x76xf32>
    %15 = arith.addf %9, %14 : vector<16x76xf32>
    %16 = vector.extract_strided_slice %3 {offsets = [0, 2], sizes = [16, 1], strides = [1, 1]} : vector<16x4xi32> to vector<16x1xi32>
    %17 = vector.broadcast %16 : vector<16x1xi32> to vector<16x76xi32>
    %18 = arith.cmpi eq, %17, %4 : vector<16x76xi32>
    %19 = arith.extui %18 : vector<16x76xi1> to vector<16x76xi32>
    %20 = arith.sitofp %19 : vector<16x76xi32> to vector<16x76xf32>
    %21 = arith.addf %15, %20 : vector<16x76xf32>
    %22 = vector.extract_strided_slice %3 {offsets = [0, 3], sizes = [16, 1], strides = [1, 1]} : vector<16x4xi32> to vector<16x1xi32>
    %23 = vector.broadcast %22 : vector<16x1xi32> to vector<16x76xi32>
    %24 = arith.cmpi eq, %23, %4 : vector<16x76xi32>
    %25 = arith.extui %24 : vector<16x76xi1> to vector<16x76xi32>
    %26 = arith.sitofp %25 : vector<16x76xi32> to vector<16x76xf32>
    %27 = arith.addf %21, %26 : vector<16x76xf32>
    %c0_5 = arith.constant 0 : index
    %c0_6 = arith.constant 0 : index
    %28 = vector.load %arg4[%c0_5, %c0_6] : memref<76x128xf32, #tpu.memory_space<vmem>>, vector<76x128xf32>
    %cst_7 = arith.constant dense<0.000000e+00> : vector<16x128xf32>
    %29 = tpu.matmul %27, %28, %cst_7 {dimension_numbers = #tpu.dot_dimension_numbers<[1], [0], [0], [1], [0, 0, 1, 1], [], []>} : vector<16x76xf32>, vector<76x128xf32>, vector<16x128xf32> -> vector<16x128xf32>
    %30 = arith.addf %2, %29 : vector<16x128xf32>
    %c0_8 = arith.constant 0 : index
    %c0_9 = arith.constant 0 : index
    %31 = vector.load %arg5[%c0_8, %c0_9] : memref<16x128xf32, #tpu.memory_space<vmem>>, vector<16x128xf32>
    tpu.vector_store %arg5[%c0_8, %c0_9], %30 {strides = array<i32>} : memref<16x128xf32, #tpu.memory_space<vmem>>, vector<16x128xf32>,
    return
  }
  func.func @transform_0(%arg0: i32) -> (i32, i32) {
    %c0_i32 = arith.constant 0 : i32
    %c0_i32_0 = arith.constant 0 : i32
    return %arg0, %c0_i32 : i32, i32
  }
  func.func @transform_1(%arg0: i32) -> (i32, i32) {
    %c0_i32 = arith.constant 0 : i32
    %c0_i32_0 = arith.constant 0 : i32
    return %arg0, %c0_i32 : i32, i32
  }
  func.func @transform_2(%arg0: i32) -> (i32, i32) {
    %c0_i32 = arith.constant 0 : i32
    %c0_i32_0 = arith.constant 0 : i32
    %c0_i32_1 = arith.constant 0 : i32
    return %c0_i32, %c0_i32_0 : i32, i32
  }
  func.func @transform_3(%arg0: i32) -> (i32, i32) {
    %c0_i32 = arith.constant 0 : i32
    %c0_i32_0 = arith.constant 0 : i32
    %c0_i32_1 = arith.constant 0 : i32
    return %c0_i32, %c0_i32_0 : i32, i32
  }
  func.func @transform_4(%arg0: i32) -> (i32, i32) {
    %c0_i32 = arith.constant 0 : i32
    %c0_i32_0 = arith.constant 0 : i32
    return %arg0, %c0_i32 : i32, i32
  }
}

</mosaic_0001>

<llo_original>
// kernel: tpu_custom_call.1
$region0: #{tpu_custom_call.1}
  #allocation0 [shape = 'u32[]', space=smem, size = 0x4, offset = 0x4, fixed_abs, tag = 'smem constant byte address 0x4 - core index']
  #allocation1 [shape = 'u32[72,128]{1,0:T(1,128)}', space=vmem, size = 0x9000, scoped, tag = 'internal scratch']
  %s0 = inlined_call_operand.vmem [shape: f32[16,12], index: 0, kind: input, shape index: {}]
  %s1 = inlined_call_operand.vmem [shape: s32[16,4], index: 1, kind: input, shape index: {}]
  %s2 = inlined_call_operand.hbm [shape: f32[12,128], index: 2, kind: input, shape index: {}]
  %s3 = inlined_call_operand.hbm [shape: f32[76,128], index: 3, kind: input, shape index: {}]
  %s4 = inlined_call_operand.hbm [shape: f32[16,128], index: 4, kind: output, shape index: {}]
  %s5 = sld [smem:[#allocation0]]
  $region34: #{tpu_custom_call.1} parent=0
    _
  %s7 = ssub.s32 1, %s5
  %s8 = scalar_select 0, %s7, %s5
  $region1: #{tpu_custom_call.1} parent=0
    #allocation2 [shape = 'u8[8192]{0}', space=vmem, size = 0x2000, scoped, tag = 'input window, operand 2, single buffered']
    #allocation3 [shape = 's32[1]{0}', space=sflag, size = 0x4, scoped, tag = 'scoped memory for tpu_custom_call.1']
    #allocation4 [shape = 's32[1]{0}', space=sflag, size = 0x4, scoped, tag = 'scoped memory for tpu_custom_call.1']
    #allocation5 [shape = 'u8[40960]{0}', space=vmem, size = 0xa000, scoped, tag = 'input window, operand 3, single buffered']
    #allocation6 [shape = 's32[1]{0}', space=sflag, size = 0x4, scoped, tag = 'scoped memory for tpu_custom_call.1']
    #allocation7 [shape = 'u8[8192]{0}', space=vmem, size = 0x2000, scoped, tag = 'output window, operand 0, single buffered']
    %9 = vsyncpa [#allocation3], 0
    %10 = vsyncpa [#allocation6], 0
    %11 = vsyncpa [#allocation4], 0
    // Predicated region
    $region2: #{tpu_custom_call.1} parent=1 // pred_check
      _
    $region3: #{tpu_custom_call.1} parent=1 // pred_check_branch
      %13 = sbr.rel (0) target = $region5
    $region4: #{tpu_custom_call.1} parent=1 // pred_region
      _
    $region5: #{tpu_custom_call.1} parent=1 // pred_fallthru
      _
    // Predicated region
    $region6: #{tpu_custom_call.1} parent=1 // pred_check
      _
    $region7: #{tpu_custom_call.1} parent=1 // pred_check_branch
      %15 = sbr.rel (0) target = $region9
    $region8: #{tpu_custom_call.1} parent=1 // pred_region
      _
    $region9: #{tpu_custom_call.1} parent=1 // pred_fallthru
      _
    // Predicated region
    $region10: #{tpu_custom_call.1} parent=1 // pred_check
      _
    $region11: #{tpu_custom_call.1} parent=1 // pred_check_branch
      %17 = sbr.rel (0) target = $region13
    $region12: #{tpu_custom_call.1} parent=1 // pred_region
      %19 = vsyncadd [#allocation3], 0
      %s20 = sshll.u32 %s2, 4
      %s21 = int_to_ptr.hbm [resolvable:$true] %s20
      %s22 = sshll.u32 [#allocation2], 4
      %s23 = int_to_ptr.vmem [resolvable:$true] %s22
      %28 = dma.hbm_to_vmem [thread:$0]  %s21, 256, %s23, [#allocation3], 128, 128, 8
    $region13: #{tpu_custom_call.1} parent=1 // pred_fallthru
      _
    // Predicated region
    $region14: #{tpu_custom_call.1} parent=1 // pred_check
      _
    $region15: #{tpu_custom_call.1} parent=1 // pred_check_branch
      %30 = sbr.rel (0) target = $region17
    $region16: #{tpu_custom_call.1} parent=1 // pred_region
      %32 = vsyncadd [#allocation6], 0
      %s33 = sshll.u32 %s3, 4
      %s34 = int_to_ptr.hbm [resolvable:$true] %s33
      %s35 = sshll.u32 [#allocation5], 4
      %s36 = int_to_ptr.vmem [resolvable:$true] %s35
      %41 = dma.hbm_to_vmem [thread:$0]  %s34, 1280, %s36, [#allocation6], 128, 128, 8
    $region17: #{tpu_custom_call.1} parent=1 // pred_fallthru
      _
    // Predicated region
    $region18: #{tpu_custom_call.1} parent=1 // pred_check
      _
    $region19: #{tpu_custom_call.1} parent=1 // pred_check_branch
      %43 = sbr.rel (0) target = $region21
    $region20: #{tpu_custom_call.1} parent=1 // pred_region
      %45 = dma.done [#allocation3], 256
    $region21: #{tpu_custom_call.1} parent=1 // pred_fallthru
      _
    // Predicated region
    $region22: #{tpu_custom_call.1} parent=1 // pred_check
      _
    $region23: #{tpu_custom_call.1} parent=1 // pred_check_branch
      %47 = sbr.rel (0) target = $region25
    $region24: #{tpu_custom_call.1} parent=1 // pred_region
      %49 = dma.done [#allocation6], 1280
    $region25: #{tpu_custom_call.1} parent=1 // pred_fallthru
      _
    %v50 = vld [vmem:[%s0] sm:$0xff]
    %v51 = vld [vmem:[%s0 + $0x8] sm:$0xff]
    %v52 = vld [vmem:[#allocation2] sm:$0xff]
    %v53 = vld [vmem:[#allocation2 + $0x8] sm:$0xf]
    %v54 = vld [vmem:[%s1] sm:$0xff]
    %v55 = vld [vmem:[%s1 + $0x8] sm:$0xff]
    %v56 = vlaneseq
    %v57 = vand.u32 %v56, 127
    %58 = vset.pattern.permute.xlu0 0
    %59 = vperm.xlu0 %58, %v54
    %v60 = vpop.permute.xlu0 %59
    %61 = vset.pattern.permute.xlu0 0
    %62 = vperm.xlu0 %61, %v55
    %v63 = vpop.permute.xlu0 %62
    %vm64 = vcmp.eq.s32.totalorder %v60, %v57
    %vm65 = vcmp.eq.s32.totalorder %v63, %v57
    %v66 = vsel %vm64, 1, 0
    %v67 = vsel %vm65, 1, 0
    %v68 = vcvt.s32.f32 %v66
    %v69 = vcvt.s32.f32 %v67
    %70 = vset.pattern.permute.xlu0 1
    %71 = vperm.xlu0 %70, %v54
    %v72 = vpop.permute.xlu0 %71
    %73 = vset.pattern.permute.xlu0 1
    %74 = vperm.xlu0 %73, %v55
    %v75 = vpop.permute.xlu0 %74
    %vm76 = vcmp.eq.s32.totalorder %v72, %v57
    %vm77 = vcmp.eq.s32.totalorder %v75, %v57
    %v78 = vsel %vm76, 1, 0
    %v79 = vsel %vm77, 1, 0
    %v80 = vcvt.s32.f32 %v78
    %v81 = vcvt.s32.f32 %v79
    %v82 = vadd.f32 %v68, %v80
    %v83 = vadd.f32 %v69, %v81
    %84 = vset.pattern.permute.xlu0 2
    %85 = vperm.xlu0 %84, %v54
    %v86 = vpop.permute.xlu0 %85
    %87 = vset.pattern.permute.xlu0 2
    %88 = vperm.xlu0 %87, %v55
    %v89 = vpop.permute.xlu0 %88
    %vm90 = vcmp.eq.s32.totalorder %v86, %v57
    %vm91 = vcmp.eq.s32.totalorder %v89, %v57
    %v92 = vsel %vm90, 1, 0
    %v93 = vsel %vm91, 1, 0
    %v94 = vcvt.s32.f32 %v92
    %v95 = vcvt.s32.f32 %v93
    %v96 = vadd.f32 %v82, %v94
    %v97 = vadd.f32 %v83, %v95
    %98 = vset.pattern.permute.xlu0 3
    %99 = vperm.xlu0 %98, %v54
    %v100 = vpop.permute.xlu0 %99
    %101 = vset.pattern.permute.xlu0 3
    %102 = vperm.xlu0 %101, %v55
    %v103 = vpop.permute.xlu0 %102
    %vm104 = vcmp.eq.s32.totalorder %v100, %v57
    %vm105 = vcmp.eq.s32.totalorder %v103, %v57
    %v106 = vsel %vm104, 1, 0
    %v107 = vsel %vm105, 1, 0
    %v108 = vcvt.s32.f32 %v106
    %v109 = vcvt.s32.f32 %v107
    %v110 = vadd.f32 %v96, %v108
    %v111 = vadd.f32 %v97, %v109
    %v112 = vld [vmem:[#allocation5] sm:$0xff]
    %v113 = vld [vmem:[#allocation5 + $0x8] sm:$0xff]
    %v114 = vld [vmem:[#allocation5 + $0x10] sm:$0xff]
    %v115 = vld [vmem:[#allocation5 + $0x18] sm:$0xff]
    %v116 = vld [vmem:[#allocation5 + $0x20] sm:$0xff]
    %v117 = vld [vmem:[#allocation5 + $0x28] sm:$0xff]
    %v118 = vld [vmem:[#allocation5 + $0x30] sm:$0xff]
    %v119 = vld [vmem:[#allocation5 + $0x38] sm:$0xff]
    %v120 = vld [vmem:[#allocation5 + $0x40] sm:$0xff]
    %v121 = vld [vmem:[#allocation5 + $0x48] sm:$0xf]
    %vm122 = vcmask 621568
    %v124 = vsel %vm122, %v110, 0
    %v127 = vsel %vm122, %v111, 0
    %vm129 = vcmask 1043456
    %v131 = vsel %vm129, %v121, 0
    %133 = vmatpush.msra.mxu0 0.0
    %134 = vmatpush.msra.mxu0 0.0
    %135 = vmatpush.msra.mxu0 0.0
    %136 = vmatpush.msra.mxu0 0.0
    %137 = vmatpush.msra.mxu0 0.0
    %138 = vmatpush.msra.mxu0 0.0
    %139 = vmatpush.msra.mxu0 %v131
    %140 = vmatpush.msra.mxu0 %v120
    %141 = vmatpush.msra.mxu0 %v119
    %142 = vmatpush.msra.mxu0 %v118
    %143 = vmatpush.msra.mxu0 %v117
    %144 = vmatpush.msra.mxu0 %v116
    %145 = vmatpush.msra.mxu0 %v115
    %146 = vmatpush.msra.mxu0 %v114
    %147 = vmatpush.msra.mxu0 %v113
    %148 = vmatpush.msra.mxu0 %v112
    %149 = vmatmul.f32.gmra.mxu0 %v124
    %v150 = vpop.f32.mrf.mxu0
    %v151 = vadd.f32 0.0, %v150
    %152 = vmatmul.f32.gmra.mxu0 %v127
    %v153 = vpop.f32.mrf.mxu0
    %v154 = vadd.f32 0.0, %v153
    %155 = vdwg.mxu0
    %vm156 = vcmask 97280
    %v158 = vsel %vm156, %v50, 0
    %v161 = vsel %vm156, %v51, 0
    %v164 = vsel %vm129, %v53, 0
    %166 = vmatpush.msra.mxu0 0.0
    %167 = vmatpush.msra.mxu0 0.0
    %168 = vmatpush.msra.mxu0 0.0
    %169 = vmatpush.msra.mxu0 0.0
    %170 = vmatpush.msra.mxu0 0.0
    %171 = vmatpush.msra.mxu0 0.0
    %172 = vmatpush.msra.mxu0 0.0
    %173 = vmatpush.msra.mxu0 0.0
    %174 = vmatpush.msra.mxu0 0.0
    %175 = vmatpush.msra.mxu0 0.0
    %176 = vmatpush.msra.mxu0 0.0
    %177 = vmatpush.msra.mxu0 0.0
    %178 = vmatpush.msra.mxu0 0.0
    %179 = vmatpush.msra.mxu0 0.0
    %180 = vmatpush.msra.mxu0 %v164
    %181 = vmatpush.msra.mxu0 %v52
    %182 = vmatmul.f32.gmra.mxu0 %v158
    %v183 = vpop.f32.mrf.mxu0
    %v184 = vadd.f32 %v151, %v183
    %185 = vmatmul.f32.gmra.mxu0 %v161
    %v186 = vpop.f32.mrf.mxu0
    %v187 = vadd.f32 %v154, %v186
    %188 = vdwg.mxu0
    %189 = vst [vmem:[#allocation7] sm:$0xff] %v184
    %190 = vst [vmem:[#allocation7 + $0x8] sm:$0xff] %v187
    // Predicated region
    $region26: #{tpu_custom_call.1} parent=1 // pred_check
      _
    $region27: #{tpu_custom_call.1} parent=1 // pred_check_branch
      %192 = sbr.rel (0) target = $region29
    $region28: #{tpu_custom_call.1} parent=1 // pred_region
      %194 = vsyncadd [#allocation4], 0
      %s195 = sshll.u32 [#allocation7], 4
      %s196 = int_to_ptr.vmem [resolvable:$true] %s195
      %s197 = sshll.u32 %s4, 4
      %s198 = int_to_ptr.hbm [resolvable:$true] %s197
      %203 = dma.vmem_to_hbm [thread:$0]  %s196, 256, %s198, [#allocation4], 128, 128, 8
    $region29: #{tpu_custom_call.1} parent=1 // pred_fallthru
      _
    // Predicated region
    $region30: #{tpu_custom_call.1} parent=1 // pred_check
      _
    $region31: #{tpu_custom_call.1} parent=1 // pred_check_branch
      %205 = sbr.rel (0) target = $region33
    $region32: #{tpu_custom_call.1} parent=1 // pred_region
      %207 = dma.done [#allocation4], 256
    $region33: #{tpu_custom_call.1} parent=1 // pred_fallthru
      _
    %208 = vsyncpa [#allocation3], 1
    %209 = vsyncpa [#allocation6], 1
    %210 = vsyncpa [#allocation4], 1

</llo_original>
